<compile_context>
chip_gen: v7x
topology: tpu7x:2x2x1
jax: 0.10.0
libtpu: 0.0.40
codegen_flags: <defaults>
</compile_context>

<pallas_src>
import functools

import jax
import jax.numpy as jnp
from jax.experimental import pallas as pl
from jax.experimental.pallas import tpu as pltpu


# Target tile along the pixel axis.  Multiple of 128 (lane constraint).
# At e.g. B=8, C=8 this is 0.5 MiB/buffer in f32 -> ~1 MiB double-buffered,
# comfortably inside the scoped-VMEM defaults while being big enough to
# amortize the ~0.35 us per-grid-step overhead.
_P_TILE_TARGET = 2048


def _round_up(x, m):
    return ((x + m - 1) // m) * m


def wce_dce_kernel(pred_ref, label_ref, inter_ref, psum_ref, tsum_ref, ce_ref):
    x = pred_ref[...].astype(jnp.float32)            # [B, C, T] logits (f32 math)
    lab = label_ref[...]                             # [B, T] int32, -1 == padding
    B, C, T = x.shape

    # ---- numerically stable softmax statistics over the class (sublane) axis ----
    m = jnp.max(x, axis=1, keepdims=True)            # [B, 1, T]
    z = x - m
    ez = jnp.exp(z)
    sez = jnp.sum(ez, axis=1, keepdims=True)         # [B, 1, T]
    log_sez = jnp.log(sez)                           # [B, 1, T]

    # EUP approx reciprocal + one Newton step (no per-element VALU divide).
    inv = pl.reciprocal(sez, approx=True)
    inv = inv * (2.0 - sez * inv)
    p = ez * inv                                     # softmax probabilities [B, C, T]

    # ---- small class iota, broadcast against the labels (no full-tile iota) ----
    cls = jax.lax.broadcasted_iota(jnp.int32, (1, C, 1), 1)
    onehot = cls == lab[:, None, :]                  # [B, C, T] bool
    valid = (lab >= 0).astype(jnp.float32)           # [B, T] pixel-validity mask

    # ---- cross-entropy partial: only the shifted logit at the label class ----
    z_at_lab = jnp.sum(jnp.where(onehot, z, 0.0), axis=1)               # [B, T]
    ce_ref[0] = jnp.sum((log_sez[:, 0, :] - z_at_lab) * valid,
                        axis=1, keepdims=True)                          # [B, 1]

    # ---- dice statistics for this tile, masked against padded pixels ----
    inter_ref[0] = jnp.sum(jnp.where(onehot, p, 0.0), axis=2)           # [B, C]
    psum_ref[0] = jnp.sum(p * valid[:, None, :], axis=2)                # [B, C]
    tsum_ref[0] = jnp.sum(onehot.astype(jnp.float32), axis=2)           # [B, C]


@functools.partial(jax.jit,
                   static_argnames=("num_classes", "inter_weights", "p_tile"))
def wce_dce_loss(pred_nchw, label, *, num_classes=8, inter_weights=0.5, p_tile=None):
    """pred_nchw: [B, C, H, W] float logits (f32 or bf16); label: [B, H, W] int ids."""
    B, C, H, W = pred_nchw.shape
    assert C == num_classes
    P = H * W
    smooth = 1e-05

    # Keep pred in its native dtype (bf16 halves HBM traffic); upcast in-kernel.
    pred_bcp = pred_nchw.reshape(B, C, P)
    lab_bp = label.reshape(B, P).astype(jnp.int32)

    if p_tile is None:
        p_tile = min(_P_TILE_TARGET, _round_up(P, 128))
    assert p_tile % 128 == 0
    P_pad = _round_up(P, p_tile)
    num_tiles = P_pad // p_tile
    if P_pad != P:
        pred_bcp = jnp.pad(pred_bcp, ((0, 0), (0, 0), (0, P_pad - P)))
        lab_bp = jnp.pad(lab_bp, ((0, 0), (0, P_pad - P)), constant_values=-1)

    inter_p, psum_p, tsum_p, ce_p = pl.pallas_call(
        wce_dce_kernel,
        out_shape=(
            jax.ShapeDtypeStruct((num_tiles, B, C), jnp.float32),   # inter partials
            jax.ShapeDtypeStruct((num_tiles, B, C), jnp.float32),   # pred-sum partials
            jax.ShapeDtypeStruct((num_tiles, B, C), jnp.float32),   # target-count partials
            jax.ShapeDtypeStruct((num_tiles, B, 1), jnp.float32),   # CE partials
        ),
        grid_spec=pltpu.PrefetchScalarGridSpec(
            num_scalar_prefetch=0,
            grid=(num_tiles,),
            in_specs=[
                pl.BlockSpec((B, C, p_tile), lambda i: (0, 0, i)),
                pl.BlockSpec((B, p_tile), lambda i: (0, i)),
            ],
            out_specs=[
                pl.BlockSpec((1, B, C), lambda i: (i, 0, 0)),
                pl.BlockSpec((1, B, C), lambda i: (i, 0, 0)),
                pl.BlockSpec((1, B, C), lambda i: (i, 0, 0)),
                pl.BlockSpec((1, B, 1), lambda i: (i, 0, 0)),
            ],
        ),
        compiler_params=pltpu.CompilerParams(
            dimension_semantics=("parallel",),   # per-tile partials are independent
        ),
    )(pred_bcp, lab_bp)

    # ---- tiny epilogue (few hundred flops), fused into the same jit ----
    inter = jnp.sum(inter_p, axis=0)                      # [B, C]
    psum = jnp.sum(psum_p, axis=0)                        # [B, C]
    tsum = jnp.sum(tsum_p, axis=0)                        # [B, C]
    num_valid = float(B * P)                              # real (unpadded) pixels

    dice = (2.0 * inter + smooth) / (psum + tsum + smooth)            # [B, C]
    dice_loss = 1.0 - jnp.sum(dice, axis=0) / float(B)                # [C]

    # intra_weights default-None branch of the PyTorch module:
    #   weight[c] = numel(label) / (count(label == c) + 1e-05)
    counts = jnp.sum(tsum, axis=0)                                    # [C]
    weights = num_valid / (counts + 1e-05)                            # [C]
    dicel = jnp.mean(dice_loss * weights)

    ce = jnp.sum(ce_p) / num_valid
    return ce * float(inter_weights) + dicel * (1.0 - float(inter_weights))


def reference_loss(pred_nchw, label, *, num_classes=8, inter_weights=0.5):
    """Pure-JAX mirror of the PyTorch forward, for correctness checking."""
    B, C, H, W = pred_nchw.shape
    logits = pred_nchw.astype(jnp.float32)
    logp = jax.nn.log_softmax(logits, axis=1)
    onehot = jax.nn.one_hot(label, num_classes, axis=1, dtype=jnp.float32)  # [B,C,H,W]
    ce = -jnp.mean(jnp.sum(onehot * logp, axis=1))

    p = jax.nn.softmax(logits, axis=1).reshape(B, C, -1)
    t = onehot.reshape(B, C, -1)
    smooth = 1e-05
    inter = jnp.sum(p * t, axis=2)
    dice = (2.0 * inter + smooth) / (jnp.sum(p, axis=2) + jnp.sum(t, axis=2) + smooth)
    dice_loss = 1.0 - jnp.sum(dice, axis=0) / B

    counts = jnp.stack(
        [jnp.sum((label == c).astype(jnp.float32)) for c in range(num_classes)])
    weights = float(B * H * W) / (counts + 1e-05)
    dicel = jnp.mean(dice_loss * weights)
    return ce * inter_weights + dicel * (1 - inter_weights)


if __name__ == "__main__":
    num_classes = 8
    inter_weights = 0.5
    key = jax.random.PRNGKey(0)
    k1, k2, k3, k4 = jax.random.split(key, 4)

    # Case 1: canonical small shape, single tile.
    B, H, W = 2, 16, 16
    pred = jax.random.normal(k1, (B, num_classes, H, W), dtype=jnp.float32)
    label = jax.random.randint(k2, (B, H, W), 0, num_classes, dtype=jnp.int32)
    loss = jax.block_until_ready(
        wce_dce_loss(pred, label, num_classes=num_classes, inter_weights=inter_weights))
    ref = reference_loss(pred, label, num_classes=num_classes, inter_weights=inter_weights)
    assert jnp.allclose(loss, ref, rtol=1e-4, atol=1e-4), (loss, ref)

    # Case 2: P not a multiple of the tile -> multiple independent tiles + padding mask.
    B2, H2, W2 = 2, 20, 20
    pred2 = jax.random.normal(k3, (B2, num_classes, H2, W2), dtype=jnp.float32)
    label2 = jax.random.randint(k4, (B2, H2, W2), 0, num_classes, dtype=jnp.int32)
    loss2 = jax.block_until_ready(
        wce_dce_loss(pred2, label2, num_classes=num_classes,
                     inter_weights=inter_weights, p_tile=128))
    ref2 = reference_loss(pred2, label2, num_classes=num_classes,
                          inter_weights=inter_weights)
    assert jnp.allclose(loss2, ref2, rtol=1e-4, atol=1e-4), (loss2, ref2)

    # Case 3: bf16 logits path (half the HBM bytes; math still f32 in-kernel).
    loss_bf16 = jax.block_until_ready(
        wce_dce_loss(pred.astype(jnp.bfloat16), label, num_classes=num_classes,
                     inter_weights=inter_weights))
    assert jnp.allclose(loss_bf16, ref, rtol=5e-2, atol=5e-2), (loss_bf16, ref)

    print("KERNEL_OK")
</pallas_src>

<mosaic_0001>
module attributes {stable_mosaic.version = 11 : i64} {
  func.func @wce_dce_kernel(%arg0: i32, %arg1: memref<2x8x256xf32, #tpu.memory_space<vmem>>, %arg2: memref<2x256xi32, #tpu.memory_space<vmem>>, %arg3: memref<1x2x8xf32, #tpu.memory_space<vmem>>, %arg4: memref<1x2x8xf32, #tpu.memory_space<vmem>>, %arg5: memref<1x2x8xf32, #tpu.memory_space<vmem>>, %arg6: memref<1x2x1xf32, #tpu.memory_space<vmem>>) attributes {dimension_semantics = [#tpu.dimension_semantics<parallel>], iteration_bounds = array<i64: 1>, scalar_prefetch = 0 : i64, scratch_operands = 0 : i64, tpu.core_type = #tpu.core_type<tc>, window_params = [{transform_indices = @transform_0, window_bounds = array<i64: 2, 8, 256>}, {transform_indices = @transform_1, window_bounds = array<i64: 2, 256>}, {transform_indices = @transform_2, window_bounds = array<i64: 1, 2, 8>}, {transform_indices = @transform_3, window_bounds = array<i64: 1, 2, 8>}, {transform_indices = @transform_4, window_bounds = array<i64: 1, 2, 8>}, {transform_indices = @transform_5, window_bounds = array<i64: 1, 2, 1>}]} {
    %c0 = arith.constant 0 : index
    %c0_0 = arith.constant 0 : index
    %c0_1 = arith.constant 0 : index
    %0 = vector.load %arg1[%c0, %c0_0, %c0_1] : memref<2x8x256xf32, #tpu.memory_space<vmem>>, vector<2x8x256xf32>
    %c0_2 = arith.constant 0 : index
    %c0_3 = arith.constant 0 : index
    %1 = vector.load %arg2[%c0_2, %c0_3] : memref<2x256xi32, #tpu.memory_space<vmem>>, vector<2x256xi32>
    %cst = arith.constant dense<0xFF800000> : vector<2x256xf32>
    %2 = vector.multi_reduction <maximumf>, %0, %cst [1] : vector<2x8x256xf32> to vector<2x256xf32>
    %3 = vector.shape_cast %2 : vector<2x256xf32> to vector<2x1x256xf32>
    %4 = vector.broadcast %3 : vector<2x1x256xf32> to vector<2x8x256xf32>
    %5 = arith.subf %0, %4 : vector<2x8x256xf32>
    %6 = math.exp %5 : vector<2x8x256xf32>
    %cst_4 = arith.constant dense<0.000000e+00> : vector<2x256xf32>
    %7 = vector.multi_reduction <add>, %6, %cst_4 [1] : vector<2x8x256xf32> to vector<2x256xf32>
    %8 = vector.shape_cast %7 : vector<2x256xf32> to vector<2x1x256xf32>
    %9 = math.log %8 : vector<2x1x256xf32>
    %10 = tpu.reciprocal %8 {approx = true} : vector<2x1x256xf32> -> vector<2x1x256xf32>
    %11 = arith.mulf %8, %10 : vector<2x1x256xf32>
    %cst_5 = arith.constant 2.000000e+00 : f32
    %12 = vector.broadcast %cst_5 : f32 to vector<2x1x256xf32>
    %13 = arith.subf %12, %11 : vector<2x1x256xf32>
    %14 = arith.mulf %10, %13 : vector<2x1x256xf32>
    %15 = vector.broadcast %14 : vector<2x1x256xf32> to vector<2x8x256xf32>
    %16 = arith.mulf %6, %15 : vector<2x8x256xf32>
    %17 = tpu.iota {dimensions = array<i32: 1>} : vector<1x8x1xi32>
    %18 = vector.shape_cast %1 : vector<2x256xi32> to vector<2x1x256xi32>
    %19 = vector.broadcast %17 : vector<1x8x1xi32> to vector<2x8x256xi32>
    %20 = vector.broadcast %18 : vector<2x1x256xi32> to vector<2x8x256xi32>
    %21 = arith.cmpi eq, %19, %20 : vector<2x8x256xi32>
    %c0_i32 = arith.constant 0 : i32
    %22 = vector.broadcast %c0_i32 : i32 to vector<2x256xi32>
    %23 = arith.cmpi sge, %1, %22 : vector<2x256xi32>
    %24 = arith.extui %23 : vector<2x256xi1> to vector<2x256xi32>
    %25 = arith.sitofp %24 : vector<2x256xi32> to vector<2x256xf32>
    %cst_6 = arith.constant 0.000000e+00 : f32
    %26 = vector.broadcast %cst_6 : f32 to vector<2x8x256xf32>
    %27 = arith.select %21, %5, %26 : vector<2x8x256xi1>, vector<2x8x256xf32>
    %cst_7 = arith.constant dense<0.000000e+00> : vector<2x256xf32>
    %28 = vector.multi_reduction <add>, %27, %cst_7 [1] : vector<2x8x256xf32> to vector<2x256xf32>
    %29 = vector.shape_cast %9 : vector<2x1x256xf32> to vector<2x256xf32>
    %30 = arith.subf %29, %28 : vector<2x256xf32>
    %31 = arith.mulf %30, %25 : vector<2x256xf32>
    %cst_8 = arith.constant dense<0.000000e+00> : vector<2xf32>
    %32 = vector.multi_reduction <add>, %31, %cst_8 [1] : vector<2x256xf32> to vector<2xf32>
    %33 = vector.shape_cast %32 : vector<2xf32> to vector<2x1xf32>
    %c0_9 = arith.constant 0 : index
    %c0_10 = arith.constant 0 : index
    %c0_11 = arith.constant 0 : index
    %34 = vector.load %arg6[%c0_9, %c0_10, %c0_11] : memref<1x2x1xf32, #tpu.memory_space<vmem>>, vector<1x2x1xf32>
    %35 = vector.shape_cast %34 : vector<1x2x1xf32> to vector<2x1xf32>
    %36 = vector.shape_cast %33 : vector<2x1xf32> to vector<1x2x1xf32>
    tpu.vector_store %arg6[%c0_9, %c0_10, %c0_11], %36 {strides = array<i32>} : memref<1x2x1xf32, #tpu.memory_space<vmem>>, vector<1x2x1xf32>,
    %cst_12 = arith.constant 0.000000e+00 : f32
    %37 = vector.broadcast %cst_12 : f32 to vector<2x8x256xf32>
    %38 = arith.select %21, %16, %37 : vector<2x8x256xi1>, vector<2x8x256xf32>
    %cst_13 = arith.constant dense<0.000000e+00> : vector<2x8xf32>
    %39 = vector.multi_reduction <add>, %38, %cst_13 [2] : vector<2x8x256xf32> to vector<2x8xf32>
    %c0_14 = arith.constant 0 : index
    %c0_15 = arith.constant 0 : index
    %c0_16 = arith.constant 0 : index
    %40 = vector.load %arg3[%c0_14, %c0_15, %c0_16] : memref<1x2x8xf32, #tpu.memory_space<vmem>>, vector<1x2x8xf32>
    %41 = vector.shape_cast %40 : vector<1x2x8xf32> to vector<2x8xf32>
    %42 = vector.shape_cast %39 : vector<2x8xf32> to vector<1x2x8xf32>
    tpu.vector_store %arg3[%c0_14, %c0_15, %c0_16], %42 {strides = array<i32>} : memref<1x2x8xf32, #tpu.memory_space<vmem>>, vector<1x2x8xf32>,
    %43 = vector.shape_cast %25 : vector<2x256xf32> to vector<2x1x256xf32>
    %44 = vector.broadcast %43 : vector<2x1x256xf32> to vector<2x8x256xf32>
    %45 = arith.mulf %16, %44 : vector<2x8x256xf32>
    %cst_17 = arith.constant dense<0.000000e+00> : vector<2x8xf32>
    %46 = vector.multi_reduction <add>, %45, %cst_17 [2] : vector<2x8x256xf32> to vector<2x8xf32>
    %c0_18 = arith.constant 0 : index
    %c0_19 = arith.constant 0 : index
    %c0_20 = arith.constant 0 : index
    %47 = vector.load %arg4[%c0_18, %c0_19, %c0_20] : memref<1x2x8xf32, #tpu.memory_space<vmem>>, vector<1x2x8xf32>
    %48 = vector.shape_cast %47 : vector<1x2x8xf32> to vector<2x8xf32>
    %49 = vector.shape_cast %46 : vector<2x8xf32> to vector<1x2x8xf32>
    tpu.vector_store %arg4[%c0_18, %c0_19, %c0_20], %49 {strides = array<i32>} : memref<1x2x8xf32, #tpu.memory_space<vmem>>, vector<1x2x8xf32>,
    %50 = arith.extui %21 : vector<2x8x256xi1> to vector<2x8x256xi32>
    %51 = arith.sitofp %50 : vector<2x8x256xi32> to vector<2x8x256xf32>
    %cst_21 = arith.constant dense<0.000000e+00> : vector<2x8xf32>
    %52 = vector.multi_reduction <add>, %51, %cst_21 [2] : vector<2x8x256xf32> to vector<2x8xf32>
    %c0_22 = arith.constant 0 : index
    %c0_23 = arith.constant 0 : index
    %c0_24 = arith.constant 0 : index
    %53 = vector.load %arg5[%c0_22, %c0_23, %c0_24] : memref<1x2x8xf32, #tpu.memory_space<vmem>>, vector<1x2x8xf32>
    %54 = vector.shape_cast %53 : vector<1x2x8xf32> to vector<2x8xf32>
    %55 = vector.shape_cast %52 : vector<2x8xf32> to vector<1x2x8xf32>
    tpu.vector_store %arg5[%c0_22, %c0_23, %c0_24], %55 {strides = array<i32>} : memref<1x2x8xf32, #tpu.memory_space<vmem>>, vector<1x2x8xf32>,
    return
  }
  func.func @transform_0(%arg0: i32) -> (i32, i32, i32) {
    %c0_i32 = arith.constant 0 : i32
    %c0_i32_0 = arith.constant 0 : i32
    %c0_i32_1 = arith.constant 0 : i32
    return %c0_i32, %c0_i32_0, %arg0 : i32, i32, i32
  }
  func.func @transform_1(%arg0: i32) -> (i32, i32) {
    %c0_i32 = arith.constant 0 : i32
    %c0_i32_0 = arith.constant 0 : i32
    return %c0_i32, %arg0 : i32, i32
  }
  func.func @transform_2(%arg0: i32) -> (i32, i32, i32) {
    %c0_i32 = arith.constant 0 : i32
    %c0_i32_0 = arith.constant 0 : i32
    %c0_i32_1 = arith.constant 0 : i32
    return %arg0, %c0_i32, %c0_i32_0 : i32, i32, i32
  }
  func.func @transform_3(%arg0: i32) -> (i32, i32, i32) {
    %c0_i32 = arith.constant 0 : i32
    %c0_i32_0 = arith.constant 0 : i32
    %c0_i32_1 = arith.constant 0 : i32
    return %arg0, %c0_i32, %c0_i32_0 : i32, i32, i32
  }
  func.func @transform_4(%arg0: i32) -> (i32, i32, i32) {
    %c0_i32 = arith.constant 0 : i32
    %c0_i32_0 = arith.constant 0 : i32
    %c0_i32_1 = arith.constant 0 : i32
    return %arg0, %c0_i32, %c0_i32_0 : i32, i32, i32
  }
  func.func @transform_5(%arg0: i32) -> (i32, i32, i32) {
    %c0_i32 = arith.constant 0 : i32
    %c0_i32_0 = arith.constant 0 : i32
    %c0_i32_1 = arith.constant 0 : i32
    return %arg0, %c0_i32, %c0_i32_0 : i32, i32, i32
  }
}

</mosaic_0001>

<llo_original>
// kernel: wce_dce_loss.1
$region0: #{wce_dce_loss.1}
  #allocation0 [shape = 'u32[]', space=smem, size = 0x4, offset = 0x4, fixed_abs, tag = 'smem constant byte address 0x4 - core index']
  #allocation1 [shape = 'u32[144,128]{1,0:T(1,128)}', space=vmem, size = 0x12000, scoped, tag = 'internal scratch']
  %s0 = inlined_call_operand.vmem [shape: f32[2,8,256], index: 0, kind: input, shape index: {}]
  %s1 = inlined_call_operand.vmem [shape: s32[2,256], index: 1, kind: input, shape index: {}]
  %s2 = inlined_call_operand.vmem [shape: f32[1,2,8], index: 2, kind: output, shape index: {0}]
  %s3 = inlined_call_operand.vmem [shape: f32[1,2,8], index: 3, kind: output, shape index: {1}]
  %s4 = inlined_call_operand.vmem [shape: f32[1,2,8], index: 4, kind: output, shape index: {2}]
  %s5 = inlined_call_operand.vmem [shape: f32[1,2,1], index: 5, kind: output, shape index: {3}]
  %6 = xla_tuple %s2, %s3, %s4, %s5
  %s7 = sld [smem:[#allocation0]]
  $region42: #{wce_dce_loss.1} parent=0
    _
  %s9 = ssub.s32 1, %s7
  %s10 = scalar_select 0, %s9, %s7
  // Predicated region
  $region2: #{wce_dce_loss.1} parent=0 // pred_check
    _
  $region3: #{wce_dce_loss.1} parent=0 // pred_check_branch
    %12 = sbr.rel (0) target = $region5
  $region4: #{wce_dce_loss.1} parent=0 // pred_region
    _
  $region5: #{wce_dce_loss.1} parent=0 // pred_fallthru
    _
  // Predicated region
  $region6: #{wce_dce_loss.1} parent=0 // pred_check
    _
  $region7: #{wce_dce_loss.1} parent=0 // pred_check_branch
    %14 = sbr.rel (0) target = $region9
  $region8: #{wce_dce_loss.1} parent=0 // pred_region
    _
  $region9: #{wce_dce_loss.1} parent=0 // pred_fallthru
    _
  %v15 = vld [vmem:[%s0] sm:$0xff]
  %v16 = vld [vmem:[%s0 + $0x8] sm:$0xff]
  %v17 = vld [vmem:[%s0 + $0x10] sm:$0xff]
  %v18 = vld [vmem:[%s0 + $0x18] sm:$0xff]
  %v19 = vld [vmem:[%s1] sm:$0xf]
  %v20 = vrot.slane %v15, 4
  %v21 = vmax.f32 %v15, %v20
  %v22 = vrot.slane %v21, 2
  %v23 = vmax.f32 %v21, %v22
  %v24 = vrot.slane %v23, 1
  %v25 = vmax.f32 %v23, %v24
  %v26 = vrot.slane %v16, 4
  %v27 = vmax.f32 %v16, %v26
  %v28 = vrot.slane %v27, 2
  %v29 = vmax.f32 %v27, %v28
  %v30 = vrot.slane %v29, 1
  %v31 = vmax.f32 %v29, %v30
  %v32 = vrot.slane %v17, 4
  %v33 = vmax.f32 %v17, %v32
  %v34 = vrot.slane %v33, 2
  %v35 = vmax.f32 %v33, %v34
  %v36 = vrot.slane %v35, 1
  %v37 = vmax.f32 %v35, %v36
  %v38 = vrot.slane %v18, 4
  %v39 = vmax.f32 %v18, %v38
  %v40 = vrot.slane %v39, 2
  %v41 = vmax.f32 %v39, %v40
  %v42 = vrot.slane %v41, 1
  %v43 = vmax.f32 %v41, %v42
  %v44 = vsub.f32 %v15, %v25
  %v45 = vsub.f32 %v16, %v31
  %v46 = vsub.f32 %v17, %v37
  %v47 = vsub.f32 %v18, %v43
  %v48 = vmul.f32 %v44, 1.442695
  %v49 = vpow.pop %v48
  %v50 = vmul.f32 %v45, 1.442695
  %v51 = vpow.pop %v50
  %v52 = vmul.f32 %v46, 1.442695
  %v53 = vpow.pop %v52
  %v54 = vmul.f32 %v47, 1.442695
  %v55 = vpow.pop %v54
  %v56 = vrot.slane %v49, 4
  %v57 = vadd.f32 %v49, %v56
  %v58 = vrot.slane %v57, 2
  %v59 = vadd.f32 %v57, %v58
  %v60 = vrot.slane %v59, 1
  %v61 = vadd.f32 %v59, %v60
  %v62 = vrot.slane %v51, 4
  %v63 = vadd.f32 %v51, %v62
  %v64 = vrot.slane %v63, 2
  %v65 = vadd.f32 %v63, %v64
  %v66 = vrot.slane %v65, 1
  %v67 = vadd.f32 %v65, %v66
  %v68 = vrot.slane %v53, 4
  %v69 = vadd.f32 %v53, %v68
  %v70 = vrot.slane %v69, 2
  %v71 = vadd.f32 %v69, %v70
  %v72 = vrot.slane %v71, 1
  %v73 = vadd.f32 %v71, %v72
  %v74 = vrot.slane %v55, 4
  %v75 = vadd.f32 %v55, %v74
  %v76 = vrot.slane %v75, 2
  %v77 = vadd.f32 %v75, %v76
  %v78 = vrot.slane %v77, 1
  %v79 = vadd.f32 %v77, %v78
  %v80 = vlog2.pop %v61
  %v81 = vmul.f32 %v80, 0.6931472
  %v82 = vlog2.pop %v67
  %v83 = vmul.f32 %v82, 0.6931472
  %v84 = vlog2.pop %v73
  %v85 = vmul.f32 %v84, 0.6931472
  %v86 = vlog2.pop %v79
  %v87 = vmul.f32 %v86, 0.6931472
  %v88 = vrcp.pop %v61
  %v89 = vrcp.pop %v67
  %v90 = vrcp.pop %v73
  %v91 = vrcp.pop %v79
  %v92 = vmul.f32 %v61, %v88
  %v93 = vmul.f32 %v67, %v89
  %v94 = vmul.f32 %v73, %v90
  %v95 = vmul.f32 %v79, %v91
  %v96 = vsub.f32 2.0, %v92
  %v97 = vsub.f32 2.0, %v93
  %v98 = vsub.f32 2.0, %v94
  %v99 = vsub.f32 2.0, %v95
  %v100 = vmul.f32 %v88, %v96
  %v101 = vmul.f32 %v89, %v97
  %v102 = vmul.f32 %v90, %v98
  %v103 = vmul.f32 %v91, %v99
  %v104 = vmul.f32 %v49, %v100
  %v105 = vmul.f32 %v51, %v101
  %v106 = vmul.f32 %v53, %v102
  %v107 = vmul.f32 %v55, %v103
  %v108 = vlaneseq
  %v109 = vshrl.u32 %v108, 7
  %v111 = vunpack.c.l.s4 1966171168
  %v112 = vunpack.c.0.s8 %v111
  %v113 = vlaneseq
  %v114 = vshrl.u32 %v113, 7
  %v115 = vsub.s32 %v112, %v114
  %v116 = vrot.slane %v19, %v115
  %v117 = vcombine.high %v116, %v116
  %v118 = vlaneseq
  %v119 = vshrl.u32 %v118, 7
  %v120 = vsub.s32 0, %v119
  %v121 = vrot.slane %v116, %v120
  %v122 = vlaneseq
  %v123 = vshrl.u32 %v122, 7
  %v124 = vsub.s32 1, %v123
  %v125 = vrot.slane %v116, %v124
  %v126 = vlaneseq
  %v127 = vshrl.u32 %v126, 7
  %v128 = vsub.s32 0, %v127
  %v129 = vrot.slane %v117, %v128
  %v130 = vlaneseq
  %v131 = vshrl.u32 %v130, 7
  %v132 = vsub.s32 1, %v131
  %v133 = vrot.slane %v117, %v132
  %vm134 = vcmp.eq.s32.totalorder %v109, %v121
  %vm135 = vcmp.eq.s32.totalorder %v109, %v125
  %vm136 = vcmp.eq.s32.totalorder %v109, %v129
  %vm137 = vcmp.eq.s32.totalorder %v109, %v133
  %vm138 = vcmp.ge.s32.totalorder %v19, 0
  %v139 = vsel %vm138, 1, 0
  %v140 = vcvt.s32.f32 %v139
  %v141 = vsel %vm134, %v44, 0.0
  %v142 = vsel %vm135, %v45, 0.0
  %v143 = vsel %vm136, %v46, 0.0
  %v144 = vsel %vm137, %v47, 0.0
  %v145 = vrot.slane %v141, 4
  %v146 = vadd.f32 %v141, %v145
  %v147 = vrot.slane %v146, 2
  %v148 = vadd.f32 %v146, %v147
  %v149 = vrot.slane %v148, 1
  %v150 = vadd.f32 %v148, %v149
  %v151 = vrot.slane %v142, 4
  %v152 = vadd.f32 %v142, %v151
  %v153 = vrot.slane %v152, 2
  %v154 = vadd.f32 %v152, %v153
  %v155 = vrot.slane %v154, 1
  %v156 = vadd.f32 %v154, %v155
  %v157 = vrot.slane %v143, 4
  %v158 = vadd.f32 %v143, %v157
  %v159 = vrot.slane %v158, 2
  %v160 = vadd.f32 %v158, %v159
  %v161 = vrot.slane %v160, 1
  %v162 = vadd.f32 %v160, %v161
  %v163 = vrot.slane %v144, 4
  %v164 = vadd.f32 %v144, %v163
  %v165 = vrot.slane %v164, 2
  %v166 = vadd.f32 %v164, %v165
  %v167 = vrot.slane %v166, 1
  %v168 = vadd.f32 %v166, %v167
  %v169 = vsub.f32 %v81, %v150
  %v170 = vsub.f32 %v83, %v156
  %v171 = vsub.f32 %v85, %v162
  %v172 = vsub.f32 %v87, %v168
  %v175 = vunpack.c.l.s4 1983009808
  %v176 = vunpack.c.0.s8 %v175
  %v177 = vlaneseq
  %v178 = vshrl.u32 %v177, 7
  %v179 = vsub.s32 %v176, %v178
  %v180 = vrot.slane %v140, %v179
  %v181 = vcombine.high %v180, %v180
  %v182 = vrot.slane %v180, 1
  %v183 = vrot.slane %v181, 1
  %v188 = vmul.f32 %v169, %v180
  %v189 = vmul.f32 %v170, %v181
  %v190 = vmul.f32 %v171, %v182
  %v191 = vmul.f32 %v172, %v183
  %v196 = vrot.slane %v190, 7
  %vm197 = vcmask 1041409
  %v198 = vsel %vm197, %v196, %v188
  %v199 = vrot.slane %v191, 7
  %v200 = vsel %vm197, %v199, %v189
  %vm203 = vcmask 1041408
  %v204 = vsel %vm203, %v198, 0.0
  %v205 = vsel %vm203, %v200, 0.0
  %v206 = vadd.f32 %v204, %v205
  %207 = vadd.xlane.f32.xlu0 %v206
  %v208 = vpop.xlane.xlu0 %207
  %vm209 = vcmask 1024
  %210 = vst.msk [vmem:[%s5] sm:$0x3] %vm209, %v208
  %v211 = vsel %vm134, %v104, 0.0
  %v212 = vsel %vm135, %v105, 0.0
  %v213 = vsel %vm136, %v106, 0.0
  %v214 = vsel %vm137, %v107, 0.0
  %v215 = vadd.f32 %v211, %v212
  %216 = vadd.xlane.f32.xlu0 %v215
  %v217 = vpop.xlane.xlu0 %216
  %v218 = vadd.f32 %v213, %v214
  %219 = vadd.xlane.f32.xlu0 %v218
  %v220 = vpop.xlane.xlu0 %219
  %v223 = vlaneseq
  %v224 = vand.u32 %v223, 127
  %v225 = vlaneseq
  %v226 = vshrl.u32 %v225, 7
  %v227 = vsub.s32 %v224, %v226
  %v228 = vrot.slane %v217, %v227
  %v229 = vlaneseq
  %v230 = vshrl.u32 %v229, 7
  %v231 = vsub.s32 %v224, %v230
  %v232 = vrot.slane %v220, %v231
  %v233 = vsel %vm197, %v232, %v228
  %vm235 = vcmask 58368
  %236 = vst.msk [vmem:[%s2] sm:$0x3] %vm235, %v233
  %v238 = vunpack.c.l.s4 1966171168
  %v239 = vunpack.c.0.s8 %v238
  %v240 = vlaneseq
  %v241 = vshrl.u32 %v240, 7
  %v242 = vsub.s32 %v239, %v241
  %v243 = vrot.slane %v140, %v242
  %v244 = vcombine.high %v243, %v243
  %v245 = vlaneseq
  %v246 = vshrl.u32 %v245, 7
  %v247 = vsub.s32 0, %v246
  %v248 = vrot.slane %v243, %v247
  %v249 = vlaneseq
  %v250 = vshrl.u32 %v249, 7
  %v251 = vsub.s32 1, %v250
  %v252 = vrot.slane %v243, %v251
  %v253 = vlaneseq
  %v254 = vshrl.u32 %v253, 7
  %v255 = vsub.s32 0, %v254
  %v256 = vrot.slane %v244, %v255
  %v257 = vlaneseq
  %v258 = vshrl.u32 %v257, 7
  %v259 = vsub.s32 1, %v258
  %v260 = vrot.slane %v244, %v259
  %v265 = vmul.f32 %v104, %v248
  %v266 = vmul.f32 %v105, %v252
  %v267 = vmul.f32 %v106, %v256
  %v268 = vmul.f32 %v107, %v260
  %v269 = vadd.f32 %v265, %v266
  %270 = vadd.xlane.f32.xlu0 %v269
  %v271 = vpop.xlane.xlu0 %270
  %v272 = vadd.f32 %v267, %v268
  %273 = vadd.xlane.f32.xlu0 %v272
  %v274 = vpop.xlane.xlu0 %273
  %v277 = vlaneseq
  %v278 = vshrl.u32 %v277, 7
  %v279 = vsub.s32 %v224, %v278
  %v280 = vrot.slane %v271, %v279
  %v281 = vlaneseq
  %v282 = vshrl.u32 %v281, 7
  %v283 = vsub.s32 %v224, %v282
  %v284 = vrot.slane %v274, %v283
  %v285 = vsel %vm197, %v284, %v280
  %287 = vst.msk [vmem:[%s3] sm:$0x3] %vm235, %v285
  %v288 = vsel %vm134, 1, 0
  %v289 = vsel %vm135, 1, 0
  %v290 = vsel %vm136, 1, 0
  %v291 = vsel %vm137, 1, 0
  %v292 = vcvt.s32.f32 %v288
  %v293 = vcvt.s32.f32 %v289
  %v294 = vcvt.s32.f32 %v290
  %v295 = vcvt.s32.f32 %v291
  %v296 = vadd.f32 %v292, %v293
  %297 = vadd.xlane.f32.xlu0 %v296
  %v298 = vpop.xlane.xlu0 %297
  %v299 = vadd.f32 %v294, %v295
  %300 = vadd.xlane.f32.xlu0 %v299
  %v301 = vpop.xlane.xlu0 %300
  %v304 = vlaneseq
  %v305 = vshrl.u32 %v304, 7
  %v306 = vsub.s32 %v224, %v305
  %v307 = vrot.slane %v298, %v306
  %v308 = vlaneseq
  %v309 = vshrl.u32 %v308, 7
  %v310 = vsub.s32 %v224, %v309
  %v311 = vrot.slane %v301, %v310
  %v312 = vsel %vm197, %v311, %v307
  %314 = vst.msk [vmem:[%s4] sm:$0x3] %vm235, %v312
  // Predicated region
  $region10: #{wce_dce_loss.1} parent=0 // pred_check
    _
  $region11: #{wce_dce_loss.1} parent=0 // pred_check_branch
    %316 = sbr.rel (0) target = $region13
  $region12: #{wce_dce_loss.1} parent=0 // pred_region
    _
  $region13: #{wce_dce_loss.1} parent=0 // pred_fallthru
    _
  // Predicated region
  $region14: #{wce_dce_loss.1} parent=0 // pred_check
    _
  $region15: #{wce_dce_loss.1} parent=0 // pred_check_branch
    %318 = sbr.rel (0) target = $region17
  $region16: #{wce_dce_loss.1} parent=0 // pred_region
    _
  $region17: #{wce_dce_loss.1} parent=0 // pred_fallthru
    _
  // Predicated region
  $region18: #{wce_dce_loss.1} parent=0 // pred_check
    _
  $region19: #{wce_dce_loss.1} parent=0 // pred_check_branch
    %320 = sbr.rel (0) target = $region21
  $region20: #{wce_dce_loss.1} parent=0 // pred_region
    _
  $region21: #{wce_dce_loss.1} parent=0 // pred_fallthru
    _
  // Predicated region
  $region22: #{wce_dce_loss.1} parent=0 // pred_check
    _
  $region23: #{wce_dce_loss.1} parent=0 // pred_check_branch
    %322 = sbr.rel (0) target = $region25
  $region24: #{wce_dce_loss.1} parent=0 // pred_region
    _
  $region25: #{wce_dce_loss.1} parent=0 // pred_fallthru
    _
  // Predicated region
  $region26: #{wce_dce_loss.1} parent=0 // pred_check
    _
  $region27: #{wce_dce_loss.1} parent=0 // pred_check_branch
    %324 = sbr.rel (0) target = $region29
  $region28: #{wce_dce_loss.1} parent=0 // pred_region
    _
  $region29: #{wce_dce_loss.1} parent=0 // pred_fallthru
    _
  // Predicated region
  $region30: #{wce_dce_loss.1} parent=0 // pred_check
    _
  $region31: #{wce_dce_loss.1} parent=0 // pred_check_branch
    %326 = sbr.rel (0) target = $region33
  $region32: #{wce_dce_loss.1} parent=0 // pred_region
    _
  $region33: #{wce_dce_loss.1} parent=0 // pred_fallthru
    _
  // Predicated region
  $region34: #{wce_dce_loss.1} parent=0 // pred_check
    _
  $region35: #{wce_dce_loss.1} parent=0 // pred_check_branch
    %328 = sbr.rel (0) target = $region37
  $region36: #{wce_dce_loss.1} parent=0 // pred_region
    _
  $region37: #{wce_dce_loss.1} parent=0 // pred_fallthru
    _
  // Predicated region
  $region38: #{wce_dce_loss.1} parent=0 // pred_check
    _
  $region39: #{wce_dce_loss.1} parent=0 // pred_check_branch
    %330 = sbr.rel (0) target = $region41
  $region40: #{wce_dce_loss.1} parent=0 // pred_region
    _
  $region41: #{wce_dce_loss.1} parent=0 // pred_fallthru
    _

</llo_original>
